<compile_context>
chip_gen: v5e
topology: v5e:2x2
jax: 0.10.0
libtpu: 0.0.40
codegen_flags: <defaults>
</compile_context>

<pallas_src>
import functools

import jax
import jax.numpy as jnp
import numpy as np
from jax import lax
from jax.experimental import pallas as pl
from jax.experimental.pallas import tpu as pltpu


def _layernorm(v, g, b, valid, eps=1e-5):
    """LayerNorm over the last dim. Columns >= `valid` (if any) must be exactly zero."""
    n_pad = v.shape[-1] - valid
    inv_n = 1.0 / float(valid)
    mu = jnp.sum(v, axis=-1, keepdims=True) * inv_n          # pad cols are 0 -> mean exact
    sq = jnp.sum((v - mu) ** 2, axis=-1, keepdims=True)
    if n_pad:
        sq = sq - float(n_pad) * (mu * mu)                   # remove pad-column contribution
    var = sq * inv_n                                         # biased var (torch LayerNorm)
    return (v - mu) * lax.rsqrt(var + eps) * g + b


def tfs_encoder_kernel(nhead, head_dim, dim_h, bb, seq, compute_dtype, approx_recip,
                       x_ref,
                       wq_ref, wk_ref, wv_ref,
                       bq_ref, bk_ref, bv_ref,
                       wo_ref, bo_ref,
                       g1_ref, be1_ref,
                       w1_ref, b1_ref,
                       g2_ref, be2_ref,
                       o_ref, acc_ref):
    """Grid = (batch blocks, heads).  Heads is the innermost (reduction) axis."""
    h = pl.program_id(1)
    m = bb * seq
    e = x_ref.shape[-1]
    dh_pad = w1_ref.shape[-1]

    @pl.when(h == 0)
    def _():
        acc_ref[...] = jnp.zeros_like(acc_ref)

    x32 = x_ref[...].reshape(m, e).astype(jnp.float32)        # (M, E), batch folded into M
    xc = x32.astype(compute_dtype)

    # Per-head in-projection: weights are already (E, head_dim) -> no in-kernel transpose.
    q = jnp.dot(xc, wq_ref[...], preferred_element_type=jnp.float32) + bq_ref[...]
    k = jnp.dot(xc, wk_ref[...], preferred_element_type=jnp.float32) + bk_ref[...]
    v = jnp.dot(xc, wv_ref[...], preferred_element_type=jnp.float32) + bv_ref[...]

    scale = 1.0 / (head_dim ** 0.5)
    q3 = (q * scale).astype(compute_dtype).reshape(bb, seq, head_dim)
    k3 = k.astype(compute_dtype).reshape(bb, seq, head_dim)
    v3 = v.astype(compute_dtype).reshape(bb, seq, head_dim)

    # Scaled dot-product attention, batched over the batch block (single batched einsum,
    # no lane slicing / concat).  NOTE: for large S this should be tiled over KV (flash
    # pattern with running max/sum) instead of materializing the dense (S, S) scores.
    s = jnp.einsum("bqd,bkd->bqk", q3, k3, preferred_element_type=jnp.float32)
    s = s - jnp.max(s, axis=-1, keepdims=True)
    p = jnp.exp(s)
    p = p * pl.reciprocal(jnp.sum(p, axis=-1, keepdims=True), approx=approx_recip)
    o = jnp.einsum("bqk,bkd->bqd", p.astype(compute_dtype), v3,
                   preferred_element_type=jnp.float32)        # (Bb, S, head_dim)

    # Out-projection contribution of this head, accumulated in f32 scratch.
    acc_ref[...] += jnp.dot(o.reshape(m, head_dim).astype(compute_dtype), wo_ref[...],
                            preferred_element_type=jnp.float32)

    # Epilogue (residual + norm1 + linear1 + norm2) once, on the last head step.
    @pl.when(h == nhead - 1)
    def _():
        attn = acc_ref[...] + bo_ref[...]                     # dropout1 is identity (p=0.0)
        y = _layernorm(x32 + attn, g1_ref[...], be1_ref[...], valid=e)
        z = jnp.dot(y.astype(compute_dtype), w1_ref[...],
                    preferred_element_type=jnp.float32) + b1_ref[...]   # (M, dh_pad)
        out = _layernorm(z, g2_ref[...], be2_ref[...], valid=dim_h)
        o_ref[...] = out.reshape(bb, seq, dh_pad).astype(o_ref.dtype)


def _pad_last(a, width):
    pad = width - a.shape[-1]
    if pad == 0:
        return a
    return jnp.pad(a, [(0, 0)] * (a.ndim - 1) + [(0, pad)])


def _pick_block_b(batch, seq):
    """Largest divisor of `batch` with block_b*seq >= ~128, keeping >=2 batch grid steps."""
    target = max(1, pl.cdiv(128, seq))
    best = 1
    for d in range(1, batch + 1):
        if batch % d == 0 and d <= target:
            best = d
    if batch > 1 and best == batch:      # keep >= 2 parallel steps (v7x has 2 TensorCores)
        for d in range(batch // 2, 0, -1):
            if batch % d == 0:
                best = d
                break
    return best


def tfs_encoder_pos_layer(x, params, nhead, *, compute_dtype=jnp.bfloat16, block_b=None):
    B, S, E = x.shape
    dim_h, e_in = params["w1"].shape
    assert e_in == E, "linear1 input dim must match embedding dim"
    assert E % nhead == 0, "embedding dim must be divisible by nhead"
    hd = E // nhead
    cd = jnp.dtype(compute_dtype)
    approx = cd == jnp.dtype(jnp.bfloat16)
    f32 = jnp.float32

    bb = block_b if block_b is not None else _pick_block_b(B, S)
    assert B % bb == 0
    dh_pad = pl.cdiv(dim_h, 128) * 128            # lane-dense output store

    # Head-major, pre-transposed parameters (one-time XLA cost outside the kernel).
    wq_hm = params["wq"].T.reshape(E, nhead, hd).transpose(1, 0, 2).astype(cd)   # (H, E, hd)
    wk_hm = params["wk"].T.reshape(E, nhead, hd).transpose(1, 0, 2).astype(cd)
    wv_hm = params["wv"].T.reshape(E, nhead, hd).transpose(1, 0, 2).astype(cd)
    bq_hm = params["bq"].reshape(nhead, 1, hd).astype(f32)
    bk_hm = params["bk"].reshape(nhead, 1, hd).astype(f32)
    bv_hm = params["bv"].reshape(nhead, 1, hd).astype(f32)
    wo_hm = params["wo"].T.reshape(nhead, hd, E).astype(cd)                      # (H, hd, E)
    bo = params["bo"].reshape(1, E).astype(f32)
    g1 = params["g1"].reshape(1, E).astype(f32)
    be1 = params["be1"].reshape(1, E).astype(f32)
    w1t = _pad_last(params["w1"].T, dh_pad).astype(cd)                           # (E, dh_pad)
    b1 = _pad_last(params["b1"].reshape(1, dim_h), dh_pad).astype(f32)
    g2 = _pad_last(params["g2"].reshape(1, dim_h), dh_pad).astype(f32)
    be2 = _pad_last(params["be2"].reshape(1, dim_h), dh_pad).astype(f32)

    def head_spec(shape):            # per-head block, squeezed head dim
        return pl.BlockSpec((pl.Squeezed(),) + shape, lambda b, h: (h, 0, 0))

    def const_spec(shape):           # grid-invariant block (fetched once)
        return pl.BlockSpec(shape, lambda b, h: (0, 0))

    in_specs = [
        pl.BlockSpec((bb, S, E), lambda b, h: (b, 0, 0)),                 # x
        head_spec((E, hd)), head_spec((E, hd)), head_spec((E, hd)),       # wq wk wv
        head_spec((1, hd)), head_spec((1, hd)), head_spec((1, hd)),       # bq bk bv
        head_spec((hd, E)),                                               # wo
        const_spec((1, E)),                                               # bo
        const_spec((1, E)), const_spec((1, E)),                           # norm1 gamma/beta
        const_spec((E, dh_pad)), const_spec((1, dh_pad)),                 # linear1 W.T / b
        const_spec((1, dh_pad)), const_spec((1, dh_pad)),                 # norm2 gamma/beta
    ]

    kernel = functools.partial(tfs_encoder_kernel, nhead, hd, dim_h, bb, S, cd, approx)

    out = pl.pallas_call(
        kernel,
        out_shape=jax.ShapeDtypeStruct((B, S, dh_pad), x.dtype),
        grid_spec=pltpu.PrefetchScalarGridSpec(
            num_scalar_prefetch=0,
            grid=(B // bb, nhead),                 # heads innermost (reduction / accumulate)
            in_specs=in_specs,
            out_specs=pl.BlockSpec((bb, S, dh_pad), lambda b, h: (b, 0, 0)),
            scratch_shapes=[pltpu.VMEM((bb * S, E), jnp.float32)],
        ),
        compiler_params=pltpu.CompilerParams(
            dimension_semantics=("parallel", "arbitrary"),
            # NOTE: for large E/dim_h on v7x (64 MiB VMEM) also set vmem_limit_bytes; the
            # per-head weight streaming + bf16 storage above already keeps the resident
            # weight set to ~1/nhead of the attention weights per step.
        ),
    )(x, wq_hm, wk_hm, wv_hm, bq_hm, bk_hm, bv_hm, wo_hm, bo,
      g1, be1, w1t, b1, g2, be2)

    return out[..., :dim_h] if dh_pad != dim_h else out


def make_params(key, in_dim, dim_h):
    """Deterministic synthetic parameters matching the PyTorch module's shapes."""
    ks = jax.random.split(key, 8)
    scale = 0.1
    in_proj_w = scale * jax.random.normal(ks[0], (3 * in_dim, in_dim), jnp.float32)
    in_proj_b = scale * jax.random.normal(ks[1], (3 * in_dim,), jnp.float32)
    wq, wk, wv = jnp.split(in_proj_w, 3, axis=0)
    bq, bk, bv = jnp.split(in_proj_b, 3)
    return {
        "wq": wq, "wk": wk, "wv": wv, "bq": bq, "bk": bk, "bv": bv,
        "wo": scale * jax.random.normal(ks[2], (in_dim, in_dim), jnp.float32),
        "bo": scale * jax.random.normal(ks[3], (in_dim,), jnp.float32),
        "g1": jnp.ones((in_dim,), jnp.float32),       # LayerNorm default init
        "be1": jnp.zeros((in_dim,), jnp.float32),
        "w1": scale * jax.random.normal(ks[4], (dim_h, in_dim), jnp.float32),
        "b1": scale * jax.random.normal(ks[5], (dim_h,), jnp.float32),
        "g2": jnp.ones((dim_h,), jnp.float32),
        "be2": jnp.zeros((dim_h,), jnp.float32),
    }


def reference_forward(x, params, nhead):
    """Pure-JAX f32 reference reproducing the PyTorch forward."""
    B, S, E = x.shape
    hd = E // nhead
    q = x @ params["wq"].T + params["bq"]
    k = x @ params["wk"].T + params["bk"]
    v = x @ params["wv"].T + params["bv"]
    qh = q.reshape(B, S, nhead, hd).transpose(0, 2, 1, 3)
    kh = k.reshape(B, S, nhead, hd).transpose(0, 2, 1, 3)
    vh = v.reshape(B, S, nhead, hd).transpose(0, 2, 1, 3)
    s = jnp.einsum("bhqd,bhkd->bhqk", qh, kh) / jnp.sqrt(jnp.float32(hd))
    p = jax.nn.softmax(s, axis=-1)
    o = jnp.einsum("bhqk,bhkd->bhqd", p, vh).transpose(0, 2, 1, 3).reshape(B, S, E)
    o = o @ params["wo"].T + params["bo"]

    def ln(v_, g, b, eps=1e-5):
        mu = jnp.mean(v_, axis=-1, keepdims=True)
        var = jnp.mean((v_ - mu) ** 2, axis=-1, keepdims=True)
        return (v_ - mu) * lax.rsqrt(var + eps) * g + b

    y = ln(x + o, params["g1"], params["be1"])
    z = y @ params["w1"].T + params["b1"]
    return ln(z, params["g2"], params["be2"])


if __name__ == "__main__":
    B, S, E, nhead, dim_h = 2, 8, 32, 4, 64

    key = jax.random.PRNGKey(0)
    kx, kp = jax.random.split(key)
    x = jax.random.normal(kx, (B, S, E), jnp.float32)
    params = make_params(kp, E, dim_h)

    ref = jax.block_until_ready(reference_forward(x, params, nhead))

    # f32 compute path: exact check against the pure-JAX reference.
    out_f32 = jax.block_until_ready(
        tfs_encoder_pos_layer(x, params, nhead, compute_dtype=jnp.float32))
    assert out_f32.shape == (B, S, dim_h)
    np.testing.assert_allclose(np.asarray(out_f32), np.asarray(ref), rtol=2e-3, atol=2e-3)

    # Default bf16 MXU-operand path (v6e/v7x throughput): looser tolerance.
    out_bf16 = jax.block_until_ready(tfs_encoder_pos_layer(x, params, nhead))
    assert out_bf16.shape == (B, S, dim_h)
    np.testing.assert_allclose(np.asarray(out_bf16), np.asarray(ref), rtol=3e-2, atol=3e-2)

    print("KERNEL_OK")
</pallas_src>

<mosaic_0001>
module attributes {stable_mosaic.version = 11 : i64} {
  func.func @tfs_encoder_kernel(%arg0: i32, %arg1: i32, %arg2: memref<1x8x32xf32, #tpu.memory_space<vmem>>, %arg3: memref<1x32x8xf32, #tpu.memory_space<vmem>>, %arg4: memref<1x32x8xf32, #tpu.memory_space<vmem>>, %arg5: memref<1x32x8xf32, #tpu.memory_space<vmem>>, %arg6: memref<1x1x8xf32, #tpu.memory_space<vmem>>, %arg7: memref<1x1x8xf32, #tpu.memory_space<vmem>>, %arg8: memref<1x1x8xf32, #tpu.memory_space<vmem>>, %arg9: memref<1x8x32xf32, #tpu.memory_space<vmem>>, %arg10: memref<1x32xf32, #tpu.memory_space<vmem>>, %arg11: memref<1x32xf32, #tpu.memory_space<vmem>>, %arg12: memref<1x32xf32, #tpu.memory_space<vmem>>, %arg13: memref<32x128xf32, #tpu.memory_space<vmem>>, %arg14: memref<1x128xf32, #tpu.memory_space<vmem>>, %arg15: memref<1x128xf32, #tpu.memory_space<vmem>>, %arg16: memref<1x128xf32, #tpu.memory_space<vmem>>, %arg17: memref<1x8x128xf32, #tpu.memory_space<vmem>>, %arg18: memref<8x32xf32, #tpu.memory_space<vmem>>) attributes {dimension_semantics = [#tpu.dimension_semantics<parallel>, #tpu.dimension_semantics<arbitrary>], iteration_bounds = array<i64: 2, 4>, scalar_prefetch = 0 : i64, scratch_operands = 1 : i64, tpu.core_type = #tpu.core_type<tc>, window_params = [{transform_indices = @transform_0, window_bounds = array<i64: 1, 8, 32>}, {transform_indices = @transform_1, window_bounds = array<i64: 1, 32, 8>}, {transform_indices = @transform_2, window_bounds = array<i64: 1, 32, 8>}, {transform_indices = @transform_3, window_bounds = array<i64: 1, 32, 8>}, {transform_indices = @transform_4, window_bounds = array<i64: 1, 1, 8>}, {transform_indices = @transform_5, window_bounds = array<i64: 1, 1, 8>}, {transform_indices = @transform_6, window_bounds = array<i64: 1, 1, 8>}, {transform_indices = @transform_7, window_bounds = array<i64: 1, 8, 32>}, {pipeline_mode = #tpu.pipeline_mode<synchronous>, transform_indices = @transform_8, window_bounds = array<i64: 1, 32>}, {pipeline_mode = #tpu.pipeline_mode<synchronous>, transform_indices = @transform_9, window_bounds = array<i64: 1, 32>}, {pipeline_mode = #tpu.pipeline_mode<synchronous>, transform_indices = @transform_10, window_bounds = array<i64: 1, 32>}, {pipeline_mode = #tpu.pipeline_mode<synchronous>, transform_indices = @transform_11, window_bounds = array<i64: 32, 128>}, {pipeline_mode = #tpu.pipeline_mode<synchronous>, transform_indices = @transform_12, window_bounds = array<i64: 1, 128>}, {pipeline_mode = #tpu.pipeline_mode<synchronous>, transform_indices = @transform_13, window_bounds = array<i64: 1, 128>}, {pipeline_mode = #tpu.pipeline_mode<synchronous>, transform_indices = @transform_14, window_bounds = array<i64: 1, 128>}, {transform_indices = @transform_15, window_bounds = array<i64: 1, 8, 128>}]} {
    %c0_i32 = arith.constant 0 : i32
    %0 = arith.cmpi eq, %arg1, %c0_i32 : i32
    %1 = arith.extui %0 : i1 to i32
    %c0_i32_0 = arith.constant 0 : i32
    %2 = arith.cmpi ne, %1, %c0_i32_0 : i32
    scf.if %2 {
      %cst_37 = arith.constant 0.000000e+00 : f32
      %53 = vector.broadcast %cst_37 : f32 to vector<8x32xf32>
      %c0_38 = arith.constant 0 : index
      %c0_39 = arith.constant 0 : index
      %54 = vector.load %arg18[%c0_38, %c0_39] : memref<8x32xf32, #tpu.memory_space<vmem>>, vector<8x32xf32>
      tpu.vector_store %arg18[%c0_38, %c0_39], %53 {strides = array<i32>} : memref<8x32xf32, #tpu.memory_space<vmem>>, vector<8x32xf32>,
    } else {
    }
    %c0 = arith.constant 0 : index
    %c0_1 = arith.constant 0 : index
    %c0_2 = arith.constant 0 : index
    %3 = vector.load %arg2[%c0, %c0_1, %c0_2] : memref<1x8x32xf32, #tpu.memory_space<vmem>>, vector<1x8x32xf32>
    %4 = vector.shape_cast %3 : vector<1x8x32xf32> to vector<8x32xf32>
    %c0_3 = arith.constant 0 : index
    %c0_4 = arith.constant 0 : index
    %c0_5 = arith.constant 0 : index
    %5 = vector.load %arg3[%c0_3, %c0_4, %c0_5] : memref<1x32x8xf32, #tpu.memory_space<vmem>>, vector<1x32x8xf32>
    %6 = vector.shape_cast %5 : vector<1x32x8xf32> to vector<32x8xf32>
    %cst = arith.constant dense<0.000000e+00> : vector<8x8xf32>
    %7 = tpu.matmul %4, %6, %cst {dimension_numbers = #tpu.dot_dimension_numbers<[1], [0], [0], [1], [0, 0, 1, 1], [], []>} : vector<8x32xf32>, vector<32x8xf32>, vector<8x8xf32> -> vector<8x8xf32>
    %c0_6 = arith.constant 0 : index
    %c0_7 = arith.constant 0 : index
    %c0_8 = arith.constant 0 : index
    %8 = vector.load %arg6[%c0_6, %c0_7, %c0_8] : memref<1x1x8xf32, #tpu.memory_space<vmem>>, vector<1x1x8xf32>
    %9 = vector.shape_cast %8 : vector<1x1x8xf32> to vector<1x8xf32>
    %10 = vector.broadcast %9 : vector<1x8xf32> to vector<8x8xf32>
    %11 = arith.addf %7, %10 : vector<8x8xf32>
    %c0_9 = arith.constant 0 : index
    %c0_10 = arith.constant 0 : index
    %c0_11 = arith.constant 0 : index
    %12 = vector.load %arg4[%c0_9, %c0_10, %c0_11] : memref<1x32x8xf32, #tpu.memory_space<vmem>>, vector<1x32x8xf32>
    %13 = vector.shape_cast %12 : vector<1x32x8xf32> to vector<32x8xf32>
    %cst_12 = arith.constant dense<0.000000e+00> : vector<8x8xf32>
    %14 = tpu.matmul %4, %13, %cst_12 {dimension_numbers = #tpu.dot_dimension_numbers<[1], [0], [0], [1], [0, 0, 1, 1], [], []>} : vector<8x32xf32>, vector<32x8xf32>, vector<8x8xf32> -> vector<8x8xf32>
    %c0_13 = arith.constant 0 : index
    %c0_14 = arith.constant 0 : index
    %c0_15 = arith.constant 0 : index
    %15 = vector.load %arg7[%c0_13, %c0_14, %c0_15] : memref<1x1x8xf32, #tpu.memory_space<vmem>>, vector<1x1x8xf32>
    %16 = vector.shape_cast %15 : vector<1x1x8xf32> to vector<1x8xf32>
    %17 = vector.broadcast %16 : vector<1x8xf32> to vector<8x8xf32>
    %18 = arith.addf %14, %17 : vector<8x8xf32>
    %c0_16 = arith.constant 0 : index
    %c0_17 = arith.constant 0 : index
    %c0_18 = arith.constant 0 : index
    %19 = vector.load %arg5[%c0_16, %c0_17, %c0_18] : memref<1x32x8xf32, #tpu.memory_space<vmem>>, vector<1x32x8xf32>
    %20 = vector.shape_cast %19 : vector<1x32x8xf32> to vector<32x8xf32>
    %cst_19 = arith.constant dense<0.000000e+00> : vector<8x8xf32>
    %21 = tpu.matmul %4, %20, %cst_19 {dimension_numbers = #tpu.dot_dimension_numbers<[1], [0], [0], [1], [0, 0, 1, 1], [], []>} : vector<8x32xf32>, vector<32x8xf32>, vector<8x8xf32> -> vector<8x8xf32>
    %c0_20 = arith.constant 0 : index
    %c0_21 = arith.constant 0 : index
    %c0_22 = arith.constant 0 : index
    %22 = vector.load %arg8[%c0_20, %c0_21, %c0_22] : memref<1x1x8xf32, #tpu.memory_space<vmem>>, vector<1x1x8xf32>
    %23 = vector.shape_cast %22 : vector<1x1x8xf32> to vector<1x8xf32>
    %24 = vector.broadcast %23 : vector<1x8xf32> to vector<8x8xf32>
    %25 = arith.addf %21, %24 : vector<8x8xf32>
    %cst_23 = arith.constant 0.353553385 : f32
    %26 = vector.broadcast %cst_23 : f32 to vector<8x8xf32>
    %27 = arith.mulf %11, %26 : vector<8x8xf32>
    %28 = vector.shape_cast %27 : vector<8x8xf32> to vector<1x8x8xf32>
    %29 = vector.shape_cast %18 : vector<8x8xf32> to vector<1x8x8xf32>
    %30 = vector.shape_cast %25 : vector<8x8xf32> to vector<1x8x8xf32>
    "tpu.trace_start"() <{level = 10 : i32, message = "bqd,bkd->bqk"}> : () -> ()
    %cst_24 = arith.constant dense<0.000000e+00> : vector<1x8x8xf32>
    %31 = tpu.matmul %28, %29, %cst_24 {dimension_numbers = #tpu.dot_dimension_numbers<[2], [2], [1], [1], [0, 0, 0, 1, 1, 1], [0], [0]>} : vector<1x8x8xf32>, vector<1x8x8xf32>, vector<1x8x8xf32> -> vector<1x8x8xf32>
    "tpu.trace_stop"() : () -> ()
    %cst_25 = arith.constant dense<0xFF800000> : vector<1x8xf32>
    %32 = vector.multi_reduction <maximumf>, %31, %cst_25 [2] : vector<1x8x8xf32> to vector<1x8xf32>
    %33 = vector.shape_cast %32 : vector<1x8xf32> to vector<1x8x1xf32>
    %34 = vector.broadcast %33 : vector<1x8x1xf32> to vector<1x8x8xf32>
    %35 = arith.subf %31, %34 : vector<1x8x8xf32>
    %36 = math.exp %35 : vector<1x8x8xf32>
    %cst_26 = arith.constant dense<0.000000e+00> : vector<1x8xf32>
    %37 = vector.multi_reduction <add>, %36, %cst_26 [2] : vector<1x8x8xf32> to vector<1x8xf32>
    %38 = vector.shape_cast %37 : vector<1x8xf32> to vector<1x8x1xf32>
    %39 = tpu.reciprocal %38 : vector<1x8x1xf32> -> vector<1x8x1xf32>
    %40 = vector.broadcast %39 : vector<1x8x1xf32> to vector<1x8x8xf32>
    %41 = arith.mulf %36, %40 : vector<1x8x8xf32>
    "tpu.trace_start"() <{level = 10 : i32, message = "bqk,bkd->bqd"}> : () -> ()
    %cst_27 = arith.constant dense<0.000000e+00> : vector<1x8x8xf32>
    %42 = tpu.matmul %41, %30, %cst_27 {dimension_numbers = #tpu.dot_dimension_numbers<[2], [1], [1], [2], [0, 0, 0, 1, 1, 2], [0], [0]>} : vector<1x8x8xf32>, vector<1x8x8xf32>, vector<1x8x8xf32> -> vector<1x8x8xf32>
    "tpu.trace_stop"() : () -> ()
    %c0_28 = arith.constant 0 : index
    %c0_29 = arith.constant 0 : index
    %43 = vector.load %arg18[%c0_28, %c0_29] : memref<8x32xf32, #tpu.memory_space<vmem>>, vector<8x32xf32>
    %44 = vector.shape_cast %42 : vector<1x8x8xf32> to vector<8x8xf32>
    %c0_30 = arith.constant 0 : index
    %c0_31 = arith.constant 0 : index
    %c0_32 = arith.constant 0 : index
    %45 = vector.load %arg9[%c0_30, %c0_31, %c0_32] : memref<1x8x32xf32, #tpu.memory_space<vmem>>, vector<1x8x32xf32>
    %46 = vector.shape_cast %45 : vector<1x8x32xf32> to vector<8x32xf32>
    %cst_33 = arith.constant dense<0.000000e+00> : vector<8x32xf32>
    %47 = tpu.matmul %44, %46, %cst_33 {dimension_numbers = #tpu.dot_dimension_numbers<[1], [0], [0], [1], [0, 0, 1, 1], [], []>} : vector<8x8xf32>, vector<8x32xf32>, vector<8x32xf32> -> vector<8x32xf32>
    %48 = arith.addf %43, %47 : vector<8x32xf32>
    %c0_34 = arith.constant 0 : index
    %c0_35 = arith.constant 0 : index
    %49 = vector.load %arg18[%c0_34, %c0_35] : memref<8x32xf32, #tpu.memory_space<vmem>>, vector<8x32xf32>
    tpu.vector_store %arg18[%c0_34, %c0_35], %48 {strides = array<i32>} : memref<8x32xf32, #tpu.memory_space<vmem>>, vector<8x32xf32>,
    %c3_i32 = arith.constant 3 : i32
    %50 = arith.cmpi eq, %arg1, %c3_i32 : i32
    %51 = arith.extui %50 : i1 to i32
    %c0_i32_36 = arith.constant 0 : i32
    %52 = arith.cmpi ne, %51, %c0_i32_36 : i32
    scf.if %52 {
      %c0_37 = arith.constant 0 : index
      %c0_38 = arith.constant 0 : index
      %53 = vector.load %arg18[%c0_37, %c0_38] : memref<8x32xf32, #tpu.memory_space<vmem>>, vector<8x32xf32>
      %c0_39 = arith.constant 0 : index
      %c0_40 = arith.constant 0 : index
      %54 = vector.load %arg10[%c0_39, %c0_40] : memref<1x32xf32, #tpu.memory_space<vmem>>, vector<1x32xf32>
      %55 = vector.broadcast %54 : vector<1x32xf32> to vector<8x32xf32>
      %56 = arith.addf %53, %55 : vector<8x32xf32>
      %57 = arith.addf %4, %56 : vector<8x32xf32>
      %c0_41 = arith.constant 0 : index
      %c0_42 = arith.constant 0 : index
      %58 = vector.load %arg11[%c0_41, %c0_42] : memref<1x32xf32, #tpu.memory_space<vmem>>, vector<1x32xf32>
      %c0_43 = arith.constant 0 : index
      %c0_44 = arith.constant 0 : index
      %59 = vector.load %arg12[%c0_43, %c0_44] : memref<1x32xf32, #tpu.memory_space<vmem>>, vector<1x32xf32>
      %cst_45 = arith.constant dense<0.000000e+00> : vector<8xf32>
      %60 = vector.multi_reduction <add>, %57, %cst_45 [1] : vector<8x32xf32> to vector<8xf32>
      %61 = vector.shape_cast %60 : vector<8xf32> to vector<8x1xf32>
      %cst_46 = arith.constant 3.125000e-02 : f32
      %62 = vector.broadcast %cst_46 : f32 to vector<8x1xf32>
      %63 = arith.mulf %61, %62 : vector<8x1xf32>
      %64 = vector.broadcast %63 : vector<8x1xf32> to vector<8x32xf32>
      %65 = arith.subf %57, %64 : vector<8x32xf32>
      %66 = arith.mulf %65, %65 : vector<8x32xf32>
      %cst_47 = arith.constant dense<0.000000e+00> : vector<8xf32>
      %67 = vector.multi_reduction <add>, %66, %cst_47 [1] : vector<8x32xf32> to vector<8xf32>
      %68 = vector.shape_cast %67 : vector<8xf32> to vector<8x1xf32>
      %cst_48 = arith.constant 3.125000e-02 : f32
      %69 = vector.broadcast %cst_48 : f32 to vector<8x1xf32>
      %70 = arith.mulf %68, %69 : vector<8x1xf32>
      %71 = vector.broadcast %63 : vector<8x1xf32> to vector<8x32xf32>
      %72 = arith.subf %57, %71 : vector<8x32xf32>
      %cst_49 = arith.constant 9.99999974E-6 : f32
      %73 = vector.broadcast %cst_49 : f32 to vector<8x1xf32>
      %74 = arith.addf %70, %73 : vector<8x1xf32>
      %75 = math.rsqrt %74 : vector<8x1xf32>
      %76 = vector.broadcast %75 : vector<8x1xf32> to vector<8x32xf32>
      %77 = arith.mulf %72, %76 : vector<8x32xf32>
      %78 = vector.broadcast %58 : vector<1x32xf32> to vector<8x32xf32>
      %79 = arith.mulf %77, %78 : vector<8x32xf32>
      %80 = vector.broadcast %59 : vector<1x32xf32> to vector<8x32xf32>
      %81 = arith.addf %79, %80 : vector<8x32xf32>
      %c0_50 = arith.constant 0 : index
      %c0_51 = arith.constant 0 : index
      %82 = vector.load %arg13[%c0_50, %c0_51] : memref<32x128xf32, #tpu.memory_space<vmem>>, vector<32x128xf32>
      %cst_52 = arith.constant dense<0.000000e+00> : vector<8x128xf32>
      %83 = tpu.matmul %81, %82, %cst_52 {dimension_numbers = #tpu.dot_dimension_numbers<[1], [0], [0], [1], [0, 0, 1, 1], [], []>} : vector<8x32xf32>, vector<32x128xf32>, vector<8x128xf32> -> vector<8x128xf32>
      %c0_53 = arith.constant 0 : index
      %c0_54 = arith.constant 0 : index
      %84 = vector.load %arg14[%c0_53, %c0_54] : memref<1x128xf32, #tpu.memory_space<vmem>>, vector<1x128xf32>
      %85 = vector.broadcast %84 : vector<1x128xf32> to vector<8x128xf32>
      %86 = arith.addf %83, %85 : vector<8x128xf32>
      %c0_55 = arith.constant 0 : index
      %c0_56 = arith.constant 0 : index
      %87 = vector.load %arg15[%c0_55, %c0_56] : memref<1x128xf32, #tpu.memory_space<vmem>>, vector<1x128xf32>
      %c0_57 = arith.constant 0 : index
      %c0_58 = arith.constant 0 : index
      %88 = vector.load %arg16[%c0_57, %c0_58] : memref<1x128xf32, #tpu.memory_space<vmem>>, vector<1x128xf32>
      %cst_59 = arith.constant dense<0.000000e+00> : vector<8xf32>
      %89 = vector.multi_reduction <add>, %86, %cst_59 [1] : vector<8x128xf32> to vector<8xf32>
      %90 = vector.shape_cast %89 : vector<8xf32> to vector<8x1xf32>
      %cst_60 = arith.constant 1.562500e-02 : f32
      %91 = vector.broadcast %cst_60 : f32 to vector<8x1xf32>
      %92 = arith.mulf %90, %91 : vector<8x1xf32>
      %93 = vector.broadcast %92 : vector<8x1xf32> to vector<8x128xf32>
      %94 = arith.subf %86, %93 : vector<8x128xf32>
      %95 = arith.mulf %94, %94 : vector<8x128xf32>
      %cst_61 = arith.constant dense<0.000000e+00> : vector<8xf32>
      %96 = vector.multi_reduction <add>, %95, %cst_61 [1] : vector<8x128xf32> to vector<8xf32>
      %97 = vector.shape_cast %96 : vector<8xf32> to vector<8x1xf32>
      %98 = arith.mulf %92, %92 : vector<8x1xf32>
      %cst_62 = arith.constant 6.400000e+01 : f32
      %99 = vector.broadcast %cst_62 : f32 to vector<8x1xf32>
      %100 = arith.mulf %99, %98 : vector<8x1xf32>
      %101 = arith.subf %97, %100 : vector<8x1xf32>
      %cst_63 = arith.constant 1.562500e-02 : f32
      %102 = vector.broadcast %cst_63 : f32 to vector<8x1xf32>
      %103 = arith.mulf %101, %102 : vector<8x1xf32>
      %104 = vector.broadcast %92 : vector<8x1xf32> to vector<8x128xf32>
      %105 = arith.subf %86, %104 : vector<8x128xf32>
      %cst_64 = arith.constant 9.99999974E-6 : f32
      %106 = vector.broadcast %cst_64 : f32 to vector<8x1xf32>
      %107 = arith.addf %103, %106 : vector<8x1xf32>
      %108 = math.rsqrt %107 : vector<8x1xf32>
      %109 = vector.broadcast %108 : vector<8x1xf32> to vector<8x128xf32>
      %110 = arith.mulf %105, %109 : vector<8x128xf32>
      %111 = vector.broadcast %87 : vector<1x128xf32> to vector<8x128xf32>
      %112 = arith.mulf %110, %111 : vector<8x128xf32>
      %113 = vector.broadcast %88 : vector<1x128xf32> to vector<8x128xf32>
      %114 = arith.addf %112, %113 : vector<8x128xf32>
      %115 = vector.shape_cast %114 : vector<8x128xf32> to vector<1x8x128xf32>
      %c0_65 = arith.constant 0 : index
      %c0_66 = arith.constant 0 : index
      %c0_67 = arith.constant 0 : index
      %116 = vector.load %arg17[%c0_65, %c0_66, %c0_67] : memref<1x8x128xf32, #tpu.memory_space<vmem>>, vector<1x8x128xf32>
      tpu.vector_store %arg17[%c0_65, %c0_66, %c0_67], %115 {strides = array<i32>} : memref<1x8x128xf32, #tpu.memory_space<vmem>>, vector<1x8x128xf32>,
    } else {
    }
    return
  }
  func.func @transform_0(%arg0: i32, %arg1: i32) -> (i32, i32, i32) {
    %c0_i32 = arith.constant 0 : i32
    %c0_i32_0 = arith.constant 0 : i32
    %c0_i32_1 = arith.constant 0 : i32
    return %arg0, %c0_i32, %c0_i32_0 : i32, i32, i32
  }
  func.func @transform_1(%arg0: i32, %arg1: i32) -> (i32, i32, i32) {
    %c0_i32 = arith.constant 0 : i32
    %c0_i32_0 = arith.constant 0 : i32
    %c0_i32_1 = arith.constant 0 : i32
    return %arg1, %c0_i32, %c0_i32_0 : i32, i32, i32
  }
  func.func @transform_2(%arg0: i32, %arg1: i32) -> (i32, i32, i32) {
    %c0_i32 = arith.constant 0 : i32
    %c0_i32_0 = arith.constant 0 : i32
    %c0_i32_1 = arith.constant 0 : i32
    return %arg1, %c0_i32, %c0_i32_0 : i32, i32, i32
  }
  func.func @transform_3(%arg0: i32, %arg1: i32) -> (i32, i32, i32) {
    %c0_i32 = arith.constant 0 : i32
    %c0_i32_0 = arith.constant 0 : i32
    %c0_i32_1 = arith.constant 0 : i32
    return %arg1, %c0_i32, %c0_i32_0 : i32, i32, i32
  }
  func.func @transform_4(%arg0: i32, %arg1: i32) -> (i32, i32, i32) {
    %c0_i32 = arith.constant 0 : i32
    %c0_i32_0 = arith.constant 0 : i32
    %c0_i32_1 = arith.constant 0 : i32
    return %arg1, %c0_i32, %c0_i32_0 : i32, i32, i32
  }
  func.func @transform_5(%arg0: i32, %arg1: i32) -> (i32, i32, i32) {
    %c0_i32 = arith.constant 0 : i32
    %c0_i32_0 = arith.constant 0 : i32
    %c0_i32_1 = arith.constant 0 : i32
    return %arg1, %c0_i32, %c0_i32_0 : i32, i32, i32
  }
  func.func @transform_6(%arg0: i32, %arg1: i32) -> (i32, i32, i32) {
    %c0_i32 = arith.constant 0 : i32
    %c0_i32_0 = arith.constant 0 : i32
    %c0_i32_1 = arith.constant 0 : i32
    return %arg1, %c0_i32, %c0_i32_0 : i32, i32, i32
  }
  func.func @transform_7(%arg0: i32, %arg1: i32) -> (i32, i32, i32) {
    %c0_i32 = arith.constant 0 : i32
    %c0_i32_0 = arith.constant 0 : i32
    %c0_i32_1 = arith.constant 0 : i32
    return %arg1, %c0_i32, %c0_i32_0 : i32, i32, i32
  }
  func.func @transform_8(%arg0: i32, %arg1: i32) -> (i32, i32) {
    %c0_i32 = arith.constant 0 : i32
    %c0_i32_0 = arith.constant 0 : i32
    %c0_i32_1 = arith.constant 0 : i32
    return %c0_i32, %c0_i32_0 : i32, i32
  }
  func.func @transform_9(%arg0: i32, %arg1: i32) -> (i32, i32) {
    %c0_i32 = arith.constant 0 : i32
    %c0_i32_0 = arith.constant 0 : i32
    %c0_i32_1 = arith.constant 0 : i32
    return %c0_i32, %c0_i32_0 : i32, i32
  }
  func.func @transform_10(%arg0: i32, %arg1: i32) -> (i32, i32) {
    %c0_i32 = arith.constant 0 : i32
    %c0_i32_0 = arith.constant 0 : i32
    %c0_i32_1 = arith.constant 0 : i32
    return %c0_i32, %c0_i32_0 : i32, i32
  }
  func.func @transform_11(%arg0: i32, %arg1: i32) -> (i32, i32) {
    %c0_i32 = arith.constant 0 : i32
    %c0_i32_0 = arith.constant 0 : i32
    %c0_i32_1 = arith.constant 0 : i32
    return %c0_i32, %c0_i32_0 : i32, i32
  }
  func.func @transform_12(%arg0: i32, %arg1: i32) -> (i32, i32) {
    %c0_i32 = arith.constant 0 : i32
    %c0_i32_0 = arith.constant 0 : i32
    %c0_i32_1 = arith.constant 0 : i32
    return %c0_i32, %c0_i32_0 : i32, i32
  }
  func.func @transform_13(%arg0: i32, %arg1: i32) -> (i32, i32) {
    %c0_i32 = arith.constant 0 : i32
    %c0_i32_0 = arith.constant 0 : i32
    %c0_i32_1 = arith.constant 0 : i32
    return %c0_i32, %c0_i32_0 : i32, i32
  }
  func.func @transform_14(%arg0: i32, %arg1: i32) -> (i32, i32) {
    %c0_i32 = arith.constant 0 : i32
    %c0_i32_0 = arith.constant 0 : i32
    %c0_i32_1 = arith.constant 0 : i32
    return %c0_i32, %c0_i32_0 : i32, i32
  }
  func.func @transform_15(%arg0: i32, %arg1: i32) -> (i32, i32, i32) {
    %c0_i32 = arith.constant 0 : i32
    %c0_i32_0 = arith.constant 0 : i32
    %c0_i32_1 = arith.constant 0 : i32
    return %arg0, %c0_i32, %c0_i32_0 : i32, i32, i32
  }
}

</mosaic_0001>

<llo_original>
// kernel: tpu_custom_call.1
$region0: #{tpu_custom_call.1}
  #allocation0 [shape = 'u32[]', space=smem, size = 0x4, offset = 0x4, fixed_abs, tag = 'smem constant byte address 0x4 - core index']
  #allocation1 [shape = 'u32[72,128]{1,0:T(1,128)}', space=vmem, size = 0x9000, scoped, tag = 'internal scratch']
  #allocation2 [shape = 'f32[8,32]{1,0:T(8,128)}', space=vmem, size = 0x1000, scoped, tag = 'scratch operand']
  %s0 = inlined_call_operand.vmem [shape: f32[2,8,32], index: 0, kind: input, shape index: {}]
  %s1 = inlined_call_operand.vmem [shape: f32[4,32,8], index: 1, kind: input, shape index: {}]
  %s2 = inlined_call_operand.vmem [shape: f32[4,32,8], index: 2, kind: input, shape index: {}]
  %s3 = inlined_call_operand.vmem [shape: f32[4,32,8], index: 3, kind: input, shape index: {}]
  %s4 = inlined_call_operand.vmem [shape: f32[4,1,8], index: 4, kind: input, shape index: {}]
  %s5 = inlined_call_operand.vmem [shape: f32[4,1,8], index: 5, kind: input, shape index: {}]
  %s6 = inlined_call_operand.vmem [shape: f32[4,1,8], index: 6, kind: input, shape index: {}]
  %s7 = inlined_call_operand.vmem [shape: f32[4,8,32], index: 7, kind: input, shape index: {}]
  %s8 = inlined_call_operand.vmem [shape: f32[1,32], index: 8, kind: input, shape index: {}]
  %s9 = inlined_call_operand.vmem [shape: f32[1,32], index: 9, kind: input, shape index: {}]
  %s10 = inlined_call_operand.vmem [shape: f32[1,32], index: 10, kind: input, shape index: {}]
  %s11 = inlined_call_operand.vmem [shape: f32[32,128], index: 11, kind: input, shape index: {}]
  %s12 = inlined_call_operand.vmem [shape: f32[1,128], index: 12, kind: input, shape index: {}]
  %s13 = inlined_call_operand.vmem [shape: f32[1,128], index: 13, kind: input, shape index: {}]
  %s14 = inlined_call_operand.vmem [shape: f32[1,128], index: 14, kind: input, shape index: {}]
  %s15 = inlined_call_operand.hbm [shape: f32[2,8,128], index: 15, kind: output, shape index: {}]
  %s16 = sld [smem:[#allocation0]]
  $region101: #{tpu_custom_call.1} parent=0
    _
  %s18 = ssub.s32 1, %s16
  %s19 = scalar_select 0, %s18, %s16
  $region1: #{tpu_custom_call.1} parent=0
    #allocation3 [shape = 'u8[8192]{0}', space=vmem, size = 0x2000, scoped, tag = 'output window, operand 0']
    #allocation4 [shape = 's32[2]{0}', space=sflag, size = 0x8, scoped, tag = 'scoped memory for tpu_custom_call.1']
    %20 = vsyncpa [#allocation4], 0
    %s21 = scalar_lea.sflag [#allocation4], 1
    %22 = vsyncpa %s21, 0
    loop: start=0, step=1, limit=10
    $region2: #{tpu_custom_call.1} parent=1 // loop_pre_header
      _
    $region3: #{tpu_custom_call.1} parent=1 // loop_header
      %s24 = sphi 0, %s28
      %p25 = scmp.ge.s32.totalorder %s24, 10
      %s31 = sphi 0, %s43
      %s32 = sphi 0, %s39
      %s33 = sphi 0, %s31
      %s34 = sphi 0, %s32
      %s35 = sphi 0, %s33
      %s36 = sphi 0, %s34
      %s46 = sphi 0, %s48
      %s49 = sphi 0, %s46
      %s50 = sphi 0, %s49
      %s66 = sphi 0, %s50
      %s72 = sphi 0, %s74
      %s75 = sphi 0, %s72
      %s76 = sphi 0, %s75
      %s92 = sphi 0, %s76
      %s98 = sphi 0, %s100
      %s101 = sphi 0, %s98
      %s102 = sphi 0, %s101
      %s118 = sphi 0, %s102
      %s124 = sphi 0, %s126
      %s127 = sphi 0, %s124
      %s128 = sphi 0, %s127
      %s144 = sphi 0, %s128
      %s150 = sphi 0, %s152
      %s153 = sphi 0, %s150
      %s154 = sphi 0, %s153
      %s170 = sphi 0, %s154
      %s176 = sphi 0, %s178
      %s179 = sphi 0, %s176
      %s180 = sphi 0, %s179
      %s196 = sphi 0, %s180
      %s202 = sphi 0, %s204
      %s205 = sphi 0, %s202
      %s206 = sphi 0, %s205
      %s222 = sphi 0, %s206
      %s228 = sphi 0, %s230
      %s231 = sphi 0, %s228
      %s232 = sphi 0, %s231
      %s248 = sphi 0, %s232
      %s252 = sphi 0, %s252
      %s254 = sphi 0, %s252
      %s255 = sphi 0, %s254
      %s269 = sphi 0, %s255
      %s273 = sphi 0, %s273
      %s275 = sphi 0, %s273
      %s276 = sphi 0, %s275
      %s290 = sphi 0, %s276
      %s294 = sphi 0, %s294
      %s296 = sphi 0, %s294
      %s297 = sphi 0, %s296
      %s311 = sphi 0, %s297
      %s315 = sphi 0, %s315
      %s317 = sphi 0, %s315
      %s318 = sphi 0, %s317
      %s332 = sphi 0, %s318
      %s336 = sphi 0, %s336
      %s338 = sphi 0, %s336
      %s339 = sphi 0, %s338
      %s353 = sphi 0, %s339
      %s357 = sphi 0, %s357
      %s359 = sphi 0, %s357
      %s360 = sphi 0, %s359
      %s374 = sphi 0, %s360
      %s378 = sphi 0, %s378
      %s380 = sphi 0, %s378
      %s381 = sphi 0, %s380
      %s395 = sphi 0, %s381
      %s401 = sphi 0, %s403
      %s404 = sphi 0, %s401
      %s405 = sphi 0, %s404
      %s421 = sphi 0, %s405
    $region4: #{tpu_custom_call.1} parent=1 // loop_header_branch
      %27 = sbr.rel (%p25) target = $region8
    $region5: #{tpu_custom_call.1} parent=1 // loop_body
      %s29 = ssub.s32 %s24, 1
      %s30 = ssub.s32 %s24, 2
      %s37 = sadd.s32 1, %s32
      %p38 = scmp.ge.s32.totalorder %s37, 4
      %s39 = scalar_select %p38, 0, %s37
      %s40 = sadd.s32 1, %s31
      %s41 = scalar_select %p38, %s40, %s31
      %p42 = scmp.ge.s32.totalorder %s41, 2
      %s43 = scalar_select %p42, 0, %s41
      %s44 = ssub.s32 %s31, %s43
      %p45 = scmp.eq.s32.totalorder %s44, 0
      %s47 = sadd.s32 %s46, 1
      %s48 = scalar_select %p45, %s46, %s47
      %p51 = pneg %p45
      %p52 = scmp.eq.s32.totalorder %s24, 7
      %p53 = por %p51, %p52
      %p54 = scmp.ne.s32.totalorder %s46, %s49
      %p55 = scmp.eq.s32.totalorder %s24, 0
      %p56 = por %p54, %p55
      %p57 = scmp.ne.s32.totalorder %s46, %s49
      %p58 = scmp.eq.s32.totalorder %s29, 7
      %p59 = por %p57, %p58
      %p60 = scmp.ne.s32.totalorder %s49, %s50
      %p61 = scmp.eq.s32.totalorder %s29, 0
      %p62 = por %p60, %p61
      %p63 = scmp.ne.s32.totalorder %s49, %s50
      %p64 = scmp.eq.s32.totalorder %s30, 7
      %p65 = por %p63, %p64
      %p67 = scmp.ne.s32.totalorder %s50, %s66
      %p68 = scmp.eq.s32.totalorder %s30, 0
      %p69 = por %p67, %p68
      %s70 = ssub.s32 %s32, %s39
      %p71 = scmp.eq.s32.totalorder %s70, 0
      %s73 = sadd.s32 %s72, 1
      %s74 = scalar_select %p71, %s72, %s73
      %p77 = pneg %p71
      %p78 = scmp.eq.s32.totalorder %s24, 7
      %p79 = por %p77, %p78
      %p80 = scmp.ne.s32.totalorder %s72, %s75
      %p81 = scmp.eq.s32.totalorder %s24, 0
      %p82 = por %p80, %p81
      %p83 = scmp.ne.s32.totalorder %s72, %s75
      %p84 = scmp.eq.s32.totalorder %s29, 7
      %p85 = por %p83, %p84
      %p86 = scmp.ne.s32.totalorder %s75, %s76
      %p87 = scmp.eq.s32.totalorder %s29, 0
      %p88 = por %p86, %p87
      %p89 = scmp.ne.s32.totalorder %s75, %s76
      %p90 = scmp.eq.s32.totalorder %s30, 7
      %p91 = por %p89, %p90
      %p93 = scmp.ne.s32.totalorder %s76, %s92
      %p94 = scmp.eq.s32.totalorder %s30, 0
      %p95 = por %p93, %p94
      %s96 = ssub.s32 %s32, %s39
      %p97 = scmp.eq.s32.totalorder %s96, 0
      %s99 = sadd.s32 %s98, 1
      %s100 = scalar_select %p97, %s98, %s99
      %p103 = pneg %p97
      %p104 = scmp.eq.s32.totalorder %s24, 7
      %p105 = por %p103, %p104
      %p106 = scmp.ne.s32.totalorder %s98, %s101
      %p107 = scmp.eq.s32.totalorder %s24, 0
      %p108 = por %p106, %p107
      %p109 = scmp.ne.s32.totalorder %s98, %s101
      %p110 = scmp.eq.s32.totalorder %s29, 7
      %p111 = por %p109, %p110
      %p112 = scmp.ne.s32.totalorder %s101, %s102
      %p113 = scmp.eq.s32.totalorder %s29, 0
      %p114 = por %p112, %p113
      %p115 = scmp.ne.s32.totalorder %s101, %s102
      %p116 = scmp.eq.s32.totalorder %s30, 7
      %p117 = por %p115, %p116
      %p119 = scmp.ne.s32.totalorder %s102, %s118
      %p120 = scmp.eq.s32.totalorder %s30, 0
      %p121 = por %p119, %p120
      %s122 = ssub.s32 %s32, %s39
      %p123 = scmp.eq.s32.totalorder %s122, 0
      %s125 = sadd.s32 %s124, 1
      %s126 = scalar_select %p123, %s124, %s125
      %p129 = pneg %p123
      %p130 = scmp.eq.s32.totalorder %s24, 7
      %p131 = por %p129, %p130
      %p132 = scmp.ne.s32.totalorder %s124, %s127
      %p133 = scmp.eq.s32.totalorder %s24, 0
      %p134 = por %p132, %p133
      %p135 = scmp.ne.s32.totalorder %s124, %s127
      %p136 = scmp.eq.s32.totalorder %s29, 7
      %p137 = por %p135, %p136
      %p138 = scmp.ne.s32.totalorder %s127, %s128
      %p139 = scmp.eq.s32.totalorder %s29, 0
      %p140 = por %p138, %p139
      %p141 = scmp.ne.s32.totalorder %s127, %s128
      %p142 = scmp.eq.s32.totalorder %s30, 7
      %p143 = por %p141, %p142
      %p145 = scmp.ne.s32.totalorder %s128, %s144
      %p146 = scmp.eq.s32.totalorder %s30, 0
      %p147 = por %p145, %p146
      %s148 = ssub.s32 %s32, %s39
      %p149 = scmp.eq.s32.totalorder %s148, 0
      %s151 = sadd.s32 %s150, 1
      %s152 = scalar_select %p149, %s150, %s151
      %p155 = pneg %p149
      %p156 = scmp.eq.s32.totalorder %s24, 7
      %p157 = por %p155, %p156
      %p158 = scmp.ne.s32.totalorder %s150, %s153
      %p159 = scmp.eq.s32.totalorder %s24, 0
      %p160 = por %p158, %p159
      %p161 = scmp.ne.s32.totalorder %s150, %s153
      %p162 = scmp.eq.s32.totalorder %s29, 7
      %p163 = por %p161, %p162
      %p164 = scmp.ne.s32.totalorder %s153, %s154
      %p165 = scmp.eq.s32.totalorder %s29, 0
      %p166 = por %p164, %p165
      %p167 = scmp.ne.s32.totalorder %s153, %s154
      %p168 = scmp.eq.s32.totalorder %s30, 7
      %p169 = por %p167, %p168
      %p171 = scmp.ne.s32.totalorder %s154, %s170
      %p172 = scmp.eq.s32.totalorder %s30, 0
      %p173 = por %p171, %p172
      %s174 = ssub.s32 %s32, %s39
      %p175 = scmp.eq.s32.totalorder %s174, 0
      %s177 = sadd.s32 %s176, 1
      %s178 = scalar_select %p175, %s176, %s177
      %p181 = pneg %p175
      %p182 = scmp.eq.s32.totalorder %s24, 7
      %p183 = por %p181, %p182
      %p184 = scmp.ne.s32.totalorder %s176, %s179
      %p185 = scmp.eq.s32.totalorder %s24, 0
      %p186 = por %p184, %p185
      %p187 = scmp.ne.s32.totalorder %s176, %s179
      %p188 = scmp.eq.s32.totalorder %s29, 7
      %p189 = por %p187, %p188
      %p190 = scmp.ne.s32.totalorder %s179, %s180
      %p191 = scmp.eq.s32.totalorder %s29, 0
      %p192 = por %p190, %p191
      %p193 = scmp.ne.s32.totalorder %s179, %s180
      %p194 = scmp.eq.s32.totalorder %s30, 7
      %p195 = por %p193, %p194
      %p197 = scmp.ne.s32.totalorder %s180, %s196
      %p198 = scmp.eq.s32.totalorder %s30, 0
      %p199 = por %p197, %p198
      %s200 = ssub.s32 %s32, %s39
      %p201 = scmp.eq.s32.totalorder %s200, 0
      %s203 = sadd.s32 %s202, 1
      %s204 = scalar_select %p201, %s202, %s203
      %p207 = pneg %p201
      %p208 = scmp.eq.s32.totalorder %s24, 7
      %p209 = por %p207, %p208
      %p210 = scmp.ne.s32.totalorder %s202, %s205
      %p211 = scmp.eq.s32.totalorder %s24, 0
      %p212 = por %p210, %p211
      %p213 = scmp.ne.s32.totalorder %s202, %s205
      %p214 = scmp.eq.s32.totalorder %s29, 7
      %p215 = por %p213, %p214
      %p216 = scmp.ne.s32.totalorder %s205, %s206
      %p217 = scmp.eq.s32.totalorder %s29, 0
      %p218 = por %p216, %p217
      %p219 = scmp.ne.s32.totalorder %s205, %s206
      %p220 = scmp.eq.s32.totalorder %s30, 7
      %p221 = por %p219, %p220
      %p223 = scmp.ne.s32.totalorder %s206, %s222
      %p224 = scmp.eq.s32.totalorder %s30, 0
      %p225 = por %p223, %p224
      %s226 = ssub.s32 %s32, %s39
      %p227 = scmp.eq.s32.totalorder %s226, 0
      %s229 = sadd.s32 %s228, 1
      %s230 = scalar_select %p227, %s228, %s229
      %p233 = pneg %p227
      %p234 = scmp.eq.s32.totalorder %s24, 7
      %p235 = por %p233, %p234
      %p236 = scmp.ne.s32.totalorder %s228, %s231
      %p237 = scmp.eq.s32.totalorder %s24, 0
      %p238 = por %p236, %p237
      %p239 = scmp.ne.s32.totalorder %s228, %s231
      %p240 = scmp.eq.s32.totalorder %s29, 7
      %p241 = por %p239, %p240
      %p242 = scmp.ne.s32.totalorder %s231, %s232
      %p243 = scmp.eq.s32.totalorder %s29, 0
      %p244 = por %p242, %p243
      %p245 = scmp.ne.s32.totalorder %s231, %s232
      %p246 = scmp.eq.s32.totalorder %s30, 7
      %p247 = por %p245, %p246
      %p249 = scmp.ne.s32.totalorder %s232, %s248
      %p250 = scmp.eq.s32.totalorder %s30, 0
      %p251 = por %p249, %p250
      %s253 = sadd.s32 %s252, 1
      %p256 = scmp.eq.s32.totalorder %s24, 7
      %p257 = scmp.ne.s32.totalorder %s252, %s254
      %p258 = scmp.eq.s32.totalorder %s24, 0
      %p259 = por %p257, %p258
      %p260 = scmp.ne.s32.totalorder %s252, %s254
      %p261 = scmp.eq.s32.totalorder %s29, 7
      %p262 = por %p260, %p261
      %p263 = scmp.ne.s32.totalorder %s254, %s255
      %p264 = scmp.eq.s32.totalorder %s29, 0
      %p265 = por %p263, %p264
      %p266 = scmp.ne.s32.totalorder %s254, %s255
      %p267 = scmp.eq.s32.totalorder %s30, 7
      %p268 = por %p266, %p267
      %p270 = scmp.ne.s32.totalorder %s255, %s269
      %p271 = scmp.eq.s32.totalorder %s30, 0
      %p272 = por %p270, %p271
      %s274 = sadd.s32 %s273, 1
      %p277 = scmp.eq.s32.totalorder %s24, 7
      %p278 = scmp.ne.s32.totalorder %s273, %s275
      %p279 = scmp.eq.s32.totalorder %s24, 0
      %p280 = por %p278, %p279
      %p281 = scmp.ne.s32.totalorder %s273, %s275
      %p282 = scmp.eq.s32.totalorder %s29, 7
      %p283 = por %p281, %p282
      %p284 = scmp.ne.s32.totalorder %s275, %s276
      %p285 = scmp.eq.s32.totalorder %s29, 0
      %p286 = por %p284, %p285
      %p287 = scmp.ne.s32.totalorder %s275, %s276
      %p288 = scmp.eq.s32.totalorder %s30, 7
      %p289 = por %p287, %p288
      %p291 = scmp.ne.s32.totalorder %s276, %s290
      %p292 = scmp.eq.s32.totalorder %s30, 0
      %p293 = por %p291, %p292
      %s295 = sadd.s32 %s294, 1
      %p298 = scmp.eq.s32.totalorder %s24, 7
      %p299 = scmp.ne.s32.totalorder %s294, %s296
      %p300 = scmp.eq.s32.totalorder %s24, 0
      %p301 = por %p299, %p300
      %p302 = scmp.ne.s32.totalorder %s294, %s296
      %p303 = scmp.eq.s32.totalorder %s29, 7
      %p304 = por %p302, %p303
      %p305 = scmp.ne.s32.totalorder %s296, %s297
      %p306 = scmp.eq.s32.totalorder %s29, 0
      %p307 = por %p305, %p306
      %p308 = scmp.ne.s32.totalorder %s296, %s297
      %p309 = scmp.eq.s32.totalorder %s30, 7
      %p310 = por %p308, %p309
      %p312 = scmp.ne.s32.totalorder %s297, %s311
      %p313 = scmp.eq.s32.totalorder %s30, 0
      %p314 = por %p312, %p313
      %s316 = sadd.s32 %s315, 1
      %p319 = scmp.eq.s32.totalorder %s24, 7
      %p320 = scmp.ne.s32.totalorder %s315, %s317
      %p321 = scmp.eq.s32.totalorder %s24, 0
      %p322 = por %p320, %p321
      %p323 = scmp.ne.s32.totalorder %s315, %s317
      %p324 = scmp.eq.s32.totalorder %s29, 7
      %p325 = por %p323, %p324
      %p326 = scmp.ne.s32.totalorder %s317, %s318
      %p327 = scmp.eq.s32.totalorder %s29, 0
      %p328 = por %p326, %p327
      %p329 = scmp.ne.s32.totalorder %s317, %s318
      %p330 = scmp.eq.s32.totalorder %s30, 7
      %p331 = por %p329, %p330
      %p333 = scmp.ne.s32.totalorder %s318, %s332
      %p334 = scmp.eq.s32.totalorder %s30, 0
      %p335 = por %p333, %p334
      %s337 = sadd.s32 %s336, 1
      %p340 = scmp.eq.s32.totalorder %s24, 7
      %p341 = scmp.ne.s32.totalorder %s336, %s338
      %p342 = scmp.eq.s32.totalorder %s24, 0
      %p343 = por %p341, %p342
      %p344 = scmp.ne.s32.totalorder %s336, %s338
      %p345 = scmp.eq.s32.totalorder %s29, 7
      %p346 = por %p344, %p345
      %p347 = scmp.ne.s32.totalorder %s338, %s339
      %p348 = scmp.eq.s32.totalorder %s29, 0
      %p349 = por %p347, %p348
      %p350 = scmp.ne.s32.totalorder %s338, %s339
      %p351 = scmp.eq.s32.totalorder %s30, 7
      %p352 = por %p350, %p351
      %p354 = scmp.ne.s32.totalorder %s339, %s353
      %p355 = scmp.eq.s32.totalorder %s30, 0
      %p356 = por %p354, %p355
      %s358 = sadd.s32 %s357, 1
      %p361 = scmp.eq.s32.totalorder %s24, 7
      %p362 = scmp.ne.s32.totalorder %s357, %s359
      %p363 = scmp.eq.s32.totalorder %s24, 0
      %p364 = por %p362, %p363
      %p365 = scmp.ne.s32.totalorder %s357, %s359
      %p366 = scmp.eq.s32.totalorder %s29, 7
      %p367 = por %p365, %p366
      %p368 = scmp.ne.s32.totalorder %s359, %s360
      %p369 = scmp.eq.s32.totalorder %s29, 0
      %p370 = por %p368, %p369
      %p371 = scmp.ne.s32.totalorder %s359, %s360
      %p372 = scmp.eq.s32.totalorder %s30, 7
      %p373 = por %p371, %p372
      %p375 = scmp.ne.s32.totalorder %s360, %s374
      %p376 = scmp.eq.s32.totalorder %s30, 0
      %p377 = por %p375, %p376
      %s379 = sadd.s32 %s378, 1
      %p382 = scmp.eq.s32.totalorder %s24, 7
      %p383 = scmp.ne.s32.totalorder %s378, %s380
      %p384 = scmp.eq.s32.totalorder %s24, 0
      %p385 = por %p383, %p384
      %p386 = scmp.ne.s32.totalorder %s378, %s380
      %p387 = scmp.eq.s32.totalorder %s29, 7
      %p388 = por %p386, %p387
      %p389 = scmp.ne.s32.totalorder %s380, %s381
      %p390 = scmp.eq.s32.totalorder %s29, 0
      %p391 = por %p389, %p390
      %p392 = scmp.ne.s32.totalorder %s380, %s381
      %p393 = scmp.eq.s32.totalorder %s30, 7
      %p394 = por %p392, %p393
      %p396 = scmp.ne.s32.totalorder %s381, %s395
      %p397 = scmp.eq.s32.totalorder %s30, 0
      %p398 = por %p396, %p397
      %s399 = ssub.s32 %s31, %s43
      %p400 = scmp.eq.s32.totalorder %s399, 0
      %s402 = sadd.s32 %s401, 1
      %s403 = scalar_select %p400, %s401, %s402
      %p406 = pneg %p400
      %p407 = scmp.eq.s32.totalorder %s24, 7
      %p408 = por %p406, %p407
      %p409 = scmp.ne.s32.totalorder %s401, %s404
      %p410 = scmp.eq.s32.totalorder %s24, 0
      %p411 = por %p409, %p410
      %p412 = scmp.ne.s32.totalorder %s401, %s404
      %p413 = scmp.eq.s32.totalorder %s29, 7
      %p414 = por %p412, %p413
      %p415 = scmp.ne.s32.totalorder %s404, %s405
      %p416 = scmp.eq.s32.totalorder %s29, 0
      %p417 = por %p415, %p416
      %p418 = scmp.ne.s32.totalorder %s404, %s405
      %p419 = scmp.eq.s32.totalorder %s30, 7
      %p420 = por %p418, %p419
      %p422 = scmp.ne.s32.totalorder %s405, %s421
      %p423 = scmp.eq.s32.totalorder %s30, 0
      %p424 = por %p422, %p423
      %p425 = scmp.le.s32.totalorder 1, %s24
      %p426 = scmp.lt.s32.totalorder %s24, 9
      %p427 = pnand %p425, %p426
      %p428 = pneg %p427
      // Predicated region
      $region9: #{tpu_custom_call.1} parent=5 // pred_check
        _
      $region10: #{tpu_custom_call.1} parent=5 // pred_check_branch
        %430 = sbr.rel (%p427) target = $region12
      $region11: #{tpu_custom_call.1} parent=5 // pred_region
        %s431 = ssub.s32 %s24, 1
        // Predicated region
        $region13: #{tpu_custom_call.1} parent=11 // pred_check
          %p432 = pneg %p265
        $region14: #{tpu_custom_call.1} parent=11 // pred_check_branch
          %434 = sbr.rel (%p432) target = $region16
        $region15: #{tpu_custom_call.1} parent=11 // pred_region
          _
        $region16: #{tpu_custom_call.1} parent=11 // pred_fallthru
          _
        // Predicated region
        $region17: #{tpu_custom_call.1} parent=11 // pred_check
          %p435 = pneg %p286
        $region18: #{tpu_custom_call.1} parent=11 // pred_check_branch
          %437 = sbr.rel (%p435) target = $region20
        $region19: #{tpu_custom_call.1} parent=11 // pred_region
          _
        $region20: #{tpu_custom_call.1} parent=11 // pred_fallthru
          _
        // Predicated region
        $region21: #{tpu_custom_call.1} parent=11 // pred_check
          %p438 = pneg %p307
        $region22: #{tpu_custom_call.1} parent=11 // pred_check_branch
          %440 = sbr.rel (%p438) target = $region24
        $region23: #{tpu_custom_call.1} parent=11 // pred_region
          _
        $region24: #{tpu_custom_call.1} parent=11 // pred_fallthru
          _
        // Predicated region
        $region25: #{tpu_custom_call.1} parent=11 // pred_check
          %p441 = pneg %p328
        $region26: #{tpu_custom_call.1} parent=11 // pred_check_branch
          %443 = sbr.rel (%p441) target = $region28
        $region27: #{tpu_custom_call.1} parent=11 // pred_region
          _
        $region28: #{tpu_custom_call.1} parent=11 // pred_fallthru
          _
        // Predicated region
        $region29: #{tpu_custom_call.1} parent=11 // pred_check
          %p444 = pneg %p349
        $region30: #{tpu_custom_call.1} parent=11 // pred_check_branch
          %446 = sbr.rel (%p444) target = $region32
        $region31: #{tpu_custom_call.1} parent=11 // pred_region
          _
        $region32: #{tpu_custom_call.1} parent=11 // pred_fallthru
          _
        // Predicated region
        $region33: #{tpu_custom_call.1} parent=11 // pred_check
          %p447 = pneg %p370
        $region34: #{tpu_custom_call.1} parent=11 // pred_check_branch
          %449 = sbr.rel (%p447) target = $region36
        $region35: #{tpu_custom_call.1} parent=11 // pred_region
          _
        $region36: #{tpu_custom_call.1} parent=11 // pred_fallthru
          _
        // Predicated region
        $region37: #{tpu_custom_call.1} parent=11 // pred_check
          %p450 = pneg %p391
        $region38: #{tpu_custom_call.1} parent=11 // pred_check_branch
          %452 = sbr.rel (%p450) target = $region40
        $region39: #{tpu_custom_call.1} parent=11 // pred_region
          _
        $region40: #{tpu_custom_call.1} parent=11 // pred_fallthru
          _
      $region12: #{tpu_custom_call.1} parent=5 // pred_fallthru
        _
      %p453 = scmp.lt.s32.totalorder %s24, 8
      // Predicated region
      $region41: #{tpu_custom_call.1} parent=5 // pred_check
        %p454 = pneg %p453
      $region42: #{tpu_custom_call.1} parent=5 // pred_check_branch
        %456 = sbr.rel (%p454) target = $region44
      $region43: #{tpu_custom_call.1} parent=5 // pred_region
        // Predicated region
        $region45: #{tpu_custom_call.1} parent=43 // pred_check
          %p457 = pneg %p56
        $region46: #{tpu_custom_call.1} parent=43 // pred_check_branch
          %459 = sbr.rel (%p457) target = $region48
        $region47: #{tpu_custom_call.1} parent=43 // pred_region
          %p460 = scmp.lt.s32.totalorder %s31, 1
          %s461 = scalar_select %p460, %s31, 1
          %s462 = smul.addr %s461, 8
          %s463 = scalar_lea.vmem %s0, %s462
        $region48: #{tpu_custom_call.1} parent=43 // pred_fallthru
          _
        // Predicated region
        $region49: #{tpu_custom_call.1} parent=43 // pred_check
          %p464 = pneg %p82
        $region50: #{tpu_custom_call.1} parent=43 // pred_check_branch
          %466 = sbr.rel (%p464) target = $region52
        $region51: #{tpu_custom_call.1} parent=43 // pred_region
          %p467 = scmp.lt.s32.totalorder %s32, 3
          %s468 = scalar_select %p467, %s32, 3
          %s469 = smul.addr %s468, 4
          %s470 = smul.addr %s469, 8
          %s471 = scalar_lea.vmem %s1, %s470
        $region52: #{tpu_custom_call.1} parent=43 // pred_fallthru
          _
        // Predicated region
        $region53: #{tpu_custom_call.1} parent=43 // pred_check
          %p472 = pneg %p108
        $region54: #{tpu_custom_call.1} parent=43 // pred_check_branch
          %474 = sbr.rel (%p472) target = $region56
        $region55: #{tpu_custom_call.1} parent=43 // pred_region
          %p475 = scmp.lt.s32.totalorder %s32, 3
          %s476 = scalar_select %p475, %s32, 3
          %s477 = smul.addr %s476, 4
          %s478 = smul.addr %s477, 8
          %s479 = scalar_lea.vmem %s2, %s478
        $region56: #{tpu_custom_call.1} parent=43 // pred_fallthru
          _
        // Predicated region
        $region57: #{tpu_custom_call.1} parent=43 // pred_check
          %p480 = pneg %p134
        $region58: #{tpu_custom_call.1} parent=43 // pred_check_branch
          %482 = sbr.rel (%p480) target = $region60
        $region59: #{tpu_custom_call.1} parent=43 // pred_region
          %p483 = scmp.lt.s32.totalorder %s32, 3
          %s484 = scalar_select %p483, %s32, 3
          %s485 = smul.addr %s484, 4
          %s486 = smul.addr %s485, 8
          %s487 = scalar_lea.vmem %s3, %s486
        $region60: #{tpu_custom_call.1} parent=43 // pred_fallthru
          _
        // Predicated region
        $region61: #{tpu_custom_call.1} parent=43 // pred_check
          %p488 = pneg %p160
        $region62: #{tpu_custom_call.1} parent=43 // pred_check_branch
          %490 = sbr.rel (%p488) target = $region64
        $region63: #{tpu_custom_call.1} parent=43 // pred_region
          %p491 = scmp.lt.s32.totalorder %s32, 3
          %s492 = scalar_select %p491, %s32, 3
          %s493 = scalar_lea.vmem %s4, %s492
        $region64: #{tpu_custom_call.1} parent=43 // pred_fallthru
          _
        // Predicated region
        $region65: #{tpu_custom_call.1} parent=43 // pred_check
          %p494 = pneg %p186
        $region66: #{tpu_custom_call.1} parent=43 // pred_check_branch
          %496 = sbr.rel (%p494) target = $region68
        $region67: #{tpu_custom_call.1} parent=43 // pred_region
          %p497 = scmp.lt.s32.totalorder %s32, 3
          %s498 = scalar_select %p497, %s32, 3
          %s499 = scalar_lea.vmem %s5, %s498
        $region68: #{tpu_custom_call.1} parent=43 // pred_fallthru
          _
        // Predicated region
        $region69: #{tpu_custom_call.1} parent=43 // pred_check
          %p500 = pneg %p212
        $region70: #{tpu_custom_call.1} parent=43 // pred_check_branch
          %502 = sbr.rel (%p500) target = $region72
        $region71: #{tpu_custom_call.1} parent=43 // pred_region
          %p503 = scmp.lt.s32.totalorder %s32, 3
          %s504 = scalar_select %p503, %s32, 3
          %s505 = scalar_lea.vmem %s6, %s504
        $region72: #{tpu_custom_call.1} parent=43 // pred_fallthru
          _
        // Predicated region
        $region73: #{tpu_custom_call.1} parent=43 // pred_check
          %p506 = pneg %p238
        $region74: #{tpu_custom_call.1} parent=43 // pred_check_branch
          %508 = sbr.rel (%p506) target = $region76
        $region75: #{tpu_custom_call.1} parent=43 // pred_region
          %p509 = scmp.lt.s32.totalorder %s32, 3
          %s510 = scalar_select %p509, %s32, 3
          %s511 = smul.addr %s510, 8
          %s512 = scalar_lea.vmem %s7, %s511
        $region76: #{tpu_custom_call.1} parent=43 // pred_fallthru
          _
      $region44: #{tpu_custom_call.1} parent=5 // pred_fallthru
        _
      %p513 = scmp.le.s32.totalorder 1, %s24
      %p514 = scmp.lt.s32.totalorder %s24, 9
      %p515 = pnand %p513, %p514
      %p516 = pneg %p515
      // Predicated region
      $region77: #{tpu_custom_call.1} parent=5 // pred_check
        _
      $region78: #{tpu_custom_call.1} parent=5 // pred_check_branch
        %518 = sbr.rel (%p515) target = $region80
      $region79: #{tpu_custom_call.1} parent=5 // pred_region
        %s519 = ssub.s32 %s24, 1
        %p520 = scmp.lt.s32.totalorder %s33, 1
        %s521 = scalar_select %p520, %s33, 1
        %s522 = smul.addr %s521, 8
        %s523 = scalar_lea.vmem %s0, %s522
        %p524 = pneg %p62
        %p525 = pneg %p59
        %p526 = scmp.lt.s32.totalorder %s34, 3
        %s527 = scalar_select %p526, %s34, 3
        %s528 = smul.addr %s527, 4
        %s529 = smul.addr %s528, 8
        %s530 = scalar_lea.vmem %s1, %s529
        %p531 = pneg %p88
        %p532 = pneg %p85
        %p533 = scmp.lt.s32.totalorder %s34, 3
        %s534 = scalar_select %p533, %s34, 3
        %s535 = smul.addr %s534, 4
        %s536 = smul.addr %s535, 8
        %s537 = scalar_lea.vmem %s2, %s536
        %p538 = pneg %p114
        %p539 = pneg %p111
        %p540 = scmp.lt.s32.totalorder %s34, 3
        %s541 = scalar_select %p540, %s34, 3
        %s542 = smul.addr %s541, 4
        %s543 = smul.addr %s542, 8
        %s544 = scalar_lea.vmem %s3, %s543
        %p545 = pneg %p140
        %p546 = pneg %p137
        %p547 = scmp.lt.s32.totalorder %s34, 3
        %s548 = scalar_select %p547, %s34, 3
        %s549 = scalar_lea.vmem %s4, %s548
        %p550 = pneg %p166
        %p551 = pneg %p163
        %p552 = scmp.lt.s32.totalorder %s34, 3
        %s553 = scalar_select %p552, %s34, 3
        %s554 = scalar_lea.vmem %s5, %s553
        %p555 = pneg %p192
        %p556 = pneg %p189
        %p557 = scmp.lt.s32.totalorder %s34, 3
        %s558 = scalar_select %p557, %s34, 3
        %s559 = scalar_lea.vmem %s6, %s558
        %p560 = pneg %p218
        %p561 = pneg %p215
        %p562 = scmp.lt.s32.totalorder %s34, 3
        %s563 = scalar_select %p562, %s34, 3
        %s564 = smul.addr %s563, 8
        %s565 = scalar_lea.vmem %s7, %s564
        %p566 = pneg %p244
        %p567 = pneg %p241
        %p568 = pneg %p265
        %p569 = pneg %p262
        %p570 = pneg %p286
        %p571 = pneg %p283
        %p572 = pneg %p307
        %p573 = pneg %p304
        %p574 = pneg %p328
        %p575 = pneg %p325
        %p576 = pneg %p349
        %p577 = pneg %p346
        %p578 = pneg %p370
        %p579 = pneg %p367
        %p580 = pneg %p391
        %p581 = pneg %p388
        %p582 = pneg %p417
        %p583 = pneg %p414
        %s584 = sand.u32 %s404, 1
        %s585 = scalar_lea.sflag [#allocation4], %s584
        %s586 = sand.u32 %s404, 1
        %s587 = smul.addr %s586, 8
        %s588 = scalar_lea.vmem [#allocation3], %s587
        %p589 = scmp.lt.s32.totalorder %s33, 1
        %s590 = scalar_select %p589, %s33, 1
        %s591 = smul.addr %s590, 8
        %s592 = scalar_lea.vmem %s0, %s591
        %p593 = scmp.lt.s32.totalorder %s34, 3
        %s594 = scalar_select %p593, %s34, 3
        %s595 = smul.addr %s594, 4
        %s596 = smul.addr %s595, 8
        %s597 = scalar_lea.vmem %s1, %s596
        %p598 = scmp.lt.s32.totalorder %s34, 3
        %s599 = scalar_select %p598, %s34, 3
        %s600 = smul.addr %s599, 4
        %s601 = smul.addr %s600, 8
        %s602 = scalar_lea.vmem %s2, %s601
        %p603 = scmp.lt.s32.totalorder %s34, 3
        %s604 = scalar_select %p603, %s34, 3
        %s605 = smul.addr %s604, 4
        %s606 = smul.addr %s605, 8
        %s607 = scalar_lea.vmem %s3, %s606
        %p608 = scmp.lt.s32.totalorder %s34, 3
        %s609 = scalar_select %p608, %s34, 3
        %s610 = scalar_lea.vmem %s4, %s609
        %p611 = scmp.lt.s32.totalorder %s34, 3
        %s612 = scalar_select %p611, %s34, 3
        %s613 = scalar_lea.vmem %s5, %s612
        %p614 = scmp.lt.s32.totalorder %s34, 3
        %s615 = scalar_select %p614, %s34, 3
        %s616 = scalar_lea.vmem %s6, %s615
        %p617 = scmp.lt.s32.totalorder %s34, 3
        %s618 = scalar_select %p617, %s34, 3
        %s619 = smul.addr %s618, 8
        %s620 = scalar_lea.vmem %s7, %s619
        %p621 = scmp.eq.s32.totalorder %s34, 0
        // Predicated region
        $region81: #{tpu_custom_call.1} parent=79 // pred_check
          %p622 = pneg %p621
        $region82: #{tpu_custom_call.1} parent=79 // pred_check_branch
          %624 = sbr.rel (%p622) target = $region84
        $region83: #{tpu_custom_call.1} parent=79 // pred_region
          %vm625 = vcmask 261120
          %626 = vst.msk [vmem:[#allocation2] sm:$0xff] %vm625, 0.0
        $region84: #{tpu_custom_call.1} parent=79 // pred_fallthru
          _
        %v627 = vld [vmem:[%s592] sm:$0xff]
        %v628 = vld [vmem:[%s597] sm:$0xff]
        %v629 = vld [vmem:[%s597 + $0x8] sm:$0xff]
        %v630 = vld [vmem:[%s597 + $0x10] sm:$0xff]
        %v631 = vld [vmem:[%s597 + $0x18] sm:$0xff]
        %v632 = vld [vmem:[%s610] sm:$0x1]
        %v634 = vperm.slane %v632, 0
        %vm636 = vcmask 261120
        %v638 = vsel %vm636, %v627, 0
        %640 = vmatpush.msra.mxu0 0.0
        %641 = vmatpush.msra.mxu0 0.0
        %642 = vmatpush.msra.mxu0 0.0
        %643 = vmatpush.msra.mxu0 0.0
        %644 = vmatpush.msra.mxu0 0.0
        %645 = vmatpush.msra.mxu0 0.0
        %646 = vmatpush.msra.mxu0 0.0
        %647 = vmatpush.msra.mxu0 0.0
        %648 = vmatpush.msra.mxu0 0.0
        %649 = vmatpush.msra.mxu0 0.0
        %650 = vmatpush.msra.mxu0 0.0
        %651 = vmatpush.msra.mxu0 0.0
        %652 = vmatpush.msra.mxu0 %v631
        %653 = vmatpush.msra.mxu0 %v630
        %654 = vmatpush.msra.mxu0 %v629
        %655 = vmatpush.msra.mxu0 %v628
        %656 = vmatmul.f32.gmra.mxu0 %v638
        %v657 = vpop.f32.mrf.mxu0
        %v658 = vadd.f32 %v634, %v657
        %659 = vdwg.mxu0
        %v660 = vld [vmem:[%s602] sm:$0xff]
        %v661 = vld [vmem:[%s602 + $0x8] sm:$0xff]
        %v662 = vld [vmem:[%s602 + $0x10] sm:$0xff]
        %v663 = vld [vmem:[%s602 + $0x18] sm:$0xff]
        %v664 = vld [vmem:[%s613] sm:$0x1]
        %v666 = vperm.slane %v664, 0
        %668 = vmatpush.msra.mxu0 0.0
        %669 = vmatpush.msra.mxu0 0.0
        %670 = vmatpush.msra.mxu0 0.0
        %671 = vmatpush.msra.mxu0 0.0
        %672 = vmatpush.msra.mxu0 0.0
        %673 = vmatpush.msra.mxu0 0.0
        %674 = vmatpush.msra.mxu0 0.0
        %675 = vmatpush.msra.mxu0 0.0
        %676 = vmatpush.msra.mxu0 0.0
        %677 = vmatpush.msra.mxu0 0.0
        %678 = vmatpush.msra.mxu0 0.0
        %679 = vmatpush.msra.mxu0 0.0
        %680 = vmatpush.msra.mxu0 %v663
        %681 = vmatpush.msra.mxu0 %v662
        %682 = vmatpush.msra.mxu0 %v661
        %683 = vmatpush.msra.mxu0 %v660
        %684 = vmatmul.f32.gmra.mxu0 %v638
        %v685 = vpop.f32.mrf.mxu0
        %v686 = vadd.f32 %v666, %v685
        %687 = vdwg.mxu0
        %v688 = vld [vmem:[%s607] sm:$0xff]
        %v689 = vld [vmem:[%s607 + $0x8] sm:$0xff]
        %v690 = vld [vmem:[%s607 + $0x10] sm:$0xff]
        %v691 = vld [vmem:[%s607 + $0x18] sm:$0xff]
        %v692 = vld [vmem:[%s616] sm:$0x1]
        %v694 = vperm.slane %v692, 0
        %696 = vmatpush.msra.mxu0 0.0
        %697 = vmatpush.msra.mxu0 0.0
        %698 = vmatpush.msra.mxu0 0.0
        %699 = vmatpush.msra.mxu0 0.0
        %700 = vmatpush.msra.mxu0 0.0
        %701 = vmatpush.msra.mxu0 0.0
        %702 = vmatpush.msra.mxu0 0.0
        %703 = vmatpush.msra.mxu0 0.0
        %704 = vmatpush.msra.mxu0 0.0
        %705 = vmatpush.msra.mxu0 0.0
        %706 = vmatpush.msra.mxu0 0.0
        %707 = vmatpush.msra.mxu0 0.0
        %708 = vmatpush.msra.mxu0 %v691
        %709 = vmatpush.msra.mxu0 %v690
        %710 = vmatpush.msra.mxu0 %v689
        %711 = vmatpush.msra.mxu0 %v688
        %712 = vmatmul.f32.gmra.mxu0 %v638
        %v713 = vpop.f32.mrf.mxu0
        %v714 = vadd.f32 %v694, %v713
        %715 = vdwg.mxu0
        %v716 = vmul.f32 %v658, 0.35355338
        %vm717 = vcmask 64512
        %v719 = vsel %vm717, %v716, 0
        %v722 = vsel %vm717, %v686, 0
        %724 = vmatpush.xpose.msra.mxu0 0.0
        %725 = vmatpush.xpose.msra.mxu0 0.0
        %726 = vmatpush.xpose.msra.mxu0 0.0
        %727 = vmatpush.xpose.msra.mxu0 0.0
        %728 = vmatpush.xpose.msra.mxu0 0.0
        %729 = vmatpush.xpose.msra.mxu0 0.0
        %730 = vmatpush.xpose.msra.mxu0 0.0
        %731 = vmatpush.xpose.msra.mxu0 0.0
        %732 = vmatpush.xpose.msra.mxu0 0.0
        %733 = vmatpush.xpose.msra.mxu0 0.0
        %734 = vmatpush.xpose.msra.mxu0 0.0
        %735 = vmatpush.xpose.msra.mxu0 0.0
        %736 = vmatpush.xpose.msra.mxu0 0.0
        %737 = vmatpush.xpose.msra.mxu0 0.0
        %738 = vmatpush.xpose.msra.mxu0 0.0
        %739 = vmatpush.xpose.msra.mxu0 %v722
        %740 = vmatmul.f32.gmra.mxu0 %v719
        %v741 = vpop.f32.mrf.mxu0
        %v742 = vadd.f32 0.0, %v741
        %743 = vdwg.mxu0
        %v744 = vsel %vm717, %v742, -inf
        %745 = vmax.xlane.f32.xlu0 %v744
        %v746 = vpop.xlane.xlu0 %745
        %v747 = vsub.f32 %v742, %v746
        %v748 = vmul.f32 %v747, 1.442695
        %v749 = vpow.pop %v748
        %v750 = vsel %vm717, %v749, 0.0
        %751 = vadd.xlane.f32.xlu0 %v750
        %v752 = vpop.xlane.xlu0 %751
        %v753 = vrcp.pop %v752
        %v754 = vmul.f32 %v752, %v753
        %v755 = vsub.f32 1.0, %v754
        %v756 = vmul.f32 %v753, %v755
        %v757 = vadd.f32 %v753, %v756
        %vm758 = vweird.f32 %v752
        %vm759 = vweird.f32 %v753
        %vm760 = vmor %vm758, %vm759
        %v761 = vsel %vm760, %v753, %v757
        %v762 = vand.u32 2147483647, %v752
        %vm763 = vcmp.eq.f32.partialorder %v762, 8.507059e+37
        %v764 = vand.u32 %v752, 2147483648
        %v765 = vor.u32 1.1754944e-38, %v764
        %v766 = vsel %vm763, %v765, %v761
        %v767 = vmul.f32 %v749, %v766
        %v769 = vsel %vm717, %v767, 0
        %771 = vmatpush.msra.mxu0 0.0
        %772 = vmatpush.msra.mxu0 0.0
        %773 = vmatpush.msra.mxu0 0.0
        %774 = vmatpush.msra.mxu0 0.0
        %775 = vmatpush.msra.mxu0 0.0
        %776 = vmatpush.msra.mxu0 0.0
        %777 = vmatpush.msra.mxu0 0.0
        %778 = vmatpush.msra.mxu0 0.0
        %779 = vmatpush.msra.mxu0 0.0
        %780 = vmatpush.msra.mxu0 0.0
        %781 = vmatpush.msra.mxu0 0.0
        %782 = vmatpush.msra.mxu0 0.0
        %783 = vmatpush.msra.mxu0 0.0
        %784 = vmatpush.msra.mxu0 0.0
        %785 = vmatpush.msra.mxu0 0.0
        %786 = vmatpush.msra.mxu0 %v714
        %787 = vmatmul.f32.gmra.mxu0 %v769
        %v788 = vpop.f32.mrf.mxu0
        %v789 = vadd.f32 0.0, %v788
        %790 = vdwg.mxu0
        %v791 = vld [vmem:[#allocation2] sm:$0xff]
        %v792 = vld [vmem:[%s620] sm:$0xff]
        %v794 = vsel %vm717, %v789, 0
        %796 = vmatpush.msra.mxu0 0.0
        %797 = vmatpush.msra.mxu0 0.0
        %798 = vmatpush.msra.mxu0 0.0
        %799 = vmatpush.msra.mxu0 0.0
        %800 = vmatpush.msra.mxu0 0.0
        %801 = vmatpush.msra.mxu0 0.0
        %802 = vmatpush.msra.mxu0 0.0
        %803 = vmatpush.msra.mxu0 0.0
        %804 = vmatpush.msra.mxu0 0.0
        %805 = vmatpush.msra.mxu0 0.0
        %806 = vmatpush.msra.mxu0 0.0
        %807 = vmatpush.msra.mxu0 0.0
        %808 = vmatpush.msra.mxu0 0.0
        %809 = vmatpush.msra.mxu0 0.0
        %810 = vmatpush.msra.mxu0 0.0
        %811 = vmatpush.msra.mxu0 %v792
        %812 = vmatmul.f32.gmra.mxu0 %v794
        %v813 = vpop.f32.mrf.mxu0
        %v814 = vadd.f32 0.0, %v813
        %815 = vdwg.mxu0
        %v816 = vadd.f32 %v791, %v814
        %817 = vst.msk [vmem:[#allocation2] sm:$0xff] %vm636, %v816
        %p818 = scmp.eq.s32.totalorder %s34, 3
        // Predicated region
        $region85: #{tpu_custom_call.1} parent=79 // pred_check
          %p819 = pneg %p818
        $region86: #{tpu_custom_call.1} parent=79 // pred_check_branch
          %821 = sbr.rel (%p819) target = $region88
        $region87: #{tpu_custom_call.1} parent=79 // pred_region
          %v822 = vld [vmem:[#allocation2] sm:$0xff]
          %v823 = vld [vmem:[%s8] sm:$0x1]
          %v825 = vperm.slane %v823, 0
          %v827 = vadd.f32 %v822, %v825
          %v828 = vadd.f32 %v627, %v827
          %v829 = vld [vmem:[%s9] sm:$0x1]
          %v830 = vld [vmem:[%s10] sm:$0x1]
          %v831 = vsel %vm636, %v828, 0.0
          %832 = vadd.xlane.f32.xlu0 %v831
          %v833 = vpop.xlane.xlu0 %832
          %v834 = vmul.f32 %v833, 0.03125
          %v835 = vsub.f32 %v828, %v834
          %v836 = vmul.f32 %v835, %v835
          %v837 = vsel %vm636, %v836, 0.0
          %838 = vadd.xlane.f32.xlu0 %v837
          %v839 = vpop.xlane.xlu0 %838
          %v840 = vmul.f32 %v839, 0.03125
          %v841 = vadd.f32 %v840, 1e-05
          %v842 = vrsqrt.pop %v841
          %v843 = vmul.f32 %v842, %v841
          %v844 = vmul.f32 %v843, %v842
          %v845 = vmul.f32 0.5, %v844
          %v846 = vsub.f32 1.5, %v845
          %v847 = vmul.f32 %v842, %v846
          %vm848 = vweird.f32 %v841
          %vm849 = vweird.f32 %v842
          %vm850 = vmor %vm848, %vm849
          %v851 = vsel %vm850, %v842, %v847
          %v852 = vmul.f32 %v835, %v851
          %v854 = vperm.slane %v829, 0
          %v856 = vmul.f32 %v852, %v854
          %v858 = vperm.slane %v830, 0
          %v860 = vadd.f32 %v856, %v858
          %v861 = vld [vmem:[%s11] sm:$0xff]
          %v862 = vld [vmem:[%s11 + $0x8] sm:$0xff]
          %v863 = vld [vmem:[%s11 + $0x10] sm:$0xff]
          %v864 = vld [vmem:[%s11 + $0x18] sm:$0xff]
          %v865 = vld [vmem:[%s12] sm:$0x1]
          %v867 = vperm.slane %v865, 0
          %v870 = vsel %vm636, %v860, 0
          %872 = vmatpush.msra.mxu0 0.0
          %873 = vmatpush.msra.mxu0 0.0
          %874 = vmatpush.msra.mxu0 0.0
          %875 = vmatpush.msra.mxu0 0.0
          %876 = vmatpush.msra.mxu0 0.0
          %877 = vmatpush.msra.mxu0 0.0
          %878 = vmatpush.msra.mxu0 0.0
          %879 = vmatpush.msra.mxu0 0.0
          %880 = vmatpush.msra.mxu0 0.0
          %881 = vmatpush.msra.mxu0 0.0
          %882 = vmatpush.msra.mxu0 0.0
          %883 = vmatpush.msra.mxu0 0.0
          %884 = vmatpush.msra.mxu0 %v864
          %885 = vmatpush.msra.mxu0 %v863
          %886 = vmatpush.msra.mxu0 %v862
          %887 = vmatpush.msra.mxu0 %v861
          %888 = vmatmul.f32.gmra.mxu0 %v870
          %v889 = vpop.f32.mrf.mxu0
          %v890 = vadd.f32 %v867, %v889
          %891 = vdwg.mxu0
          %v892 = vld [vmem:[%s13] sm:$0x1]
          %v893 = vld [vmem:[%s14] sm:$0x1]
          %894 = vadd.xlane.f32.xlu0 %v890
          %v895 = vpop.xlane.xlu0 %894
          %v896 = vmul.f32 %v895, 0.015625
          %v897 = vsub.f32 %v890, %v896
          %v898 = vmul.f32 %v897, %v897
          %899 = vadd.xlane.f32.xlu0 %v898
          %v900 = vpop.xlane.xlu0 %899
          %v901 = vmul.f32 %v896, %v896
          %v902 = vmul.f32 %v901, 64.0
          %v903 = vsub.f32 %v900, %v902
          %v904 = vmul.f32 %v903, 0.015625
          %v905 = vadd.f32 %v904, 1e-05
          %v906 = vrsqrt.pop %v905
          %v907 = vmul.f32 %v906, %v905
          %v908 = vmul.f32 %v907, %v906
          %v909 = vmul.f32 0.5, %v908
          %v910 = vsub.f32 1.5, %v909
          %v911 = vmul.f32 %v906, %v910
          %vm912 = vweird.f32 %v905
          %vm913 = vweird.f32 %v906
          %vm914 = vmor %vm912, %vm913
          %v915 = vsel %vm914, %v906, %v911
          %v916 = vmul.f32 %v897, %v915
          %v918 = vperm.slane %v892, 0
          %v920 = vmul.f32 %v916, %v918
          %v922 = vperm.slane %v893, 0
          %v924 = vadd.f32 %v920, %v922
          %925 = vst [vmem:[%s588] sm:$0xff] %v924
        $region88: #{tpu_custom_call.1} parent=79 // pred_fallthru
          _
        %s926 = sand.u32 %s404, 1
        %s927 = scalar_lea.sflag [#allocation4], %s926
        %s928 = sand.u32 %s404, 1
        %s929 = smul.addr %s928, 8
        %s930 = scalar_lea.vmem [#allocation3], %s929
        // Predicated region
        $region89: #{tpu_custom_call.1} parent=79 // pred_check
          %p931 = pneg %p414
        $region90: #{tpu_custom_call.1} parent=79 // pred_check_branch
          %933 = sbr.rel (%p931) target = $region92
        $region91: #{tpu_custom_call.1} parent=79 // pred_region
          %935 = vsyncadd %s927, 0
          %s936 = smul.addr %s33, 8
          %s937 = scalar_lea.hbm %s15, %s936
          %s939 = sshll.u32 %s930, 4
          %s940 = int_to_ptr.vmem [resolvable:$true] %s939
          %s941 = sshll.u32 %s937, 4
          %s942 = int_to_ptr.hbm [resolvable:$true] %s941
          %944 = dma.vmem_to_hbm [thread:$0]  %s940, 128, %s942, %s927
        $region92: #{tpu_custom_call.1} parent=79 // pred_fallthru
          _
      $region80: #{tpu_custom_call.1} parent=5 // pred_fallthru
        _
      %p945 = scmp.le.s32.totalorder 2, %s24
      // Predicated region
      $region93: #{tpu_custom_call.1} parent=5 // pred_check
        %p946 = pneg %p945
      $region94: #{tpu_custom_call.1} parent=5 // pred_check_branch
        %948 = sbr.rel (%p946) target = $region96
      $region95: #{tpu_custom_call.1} parent=5 // pred_region
        %s949 = ssub.s32 %s24, 2
        // Predicated region
        $region97: #{tpu_custom_call.1} parent=95 // pred_check
          %p950 = pneg %p420
        $region98: #{tpu_custom_call.1} parent=95 // pred_check_branch
          %952 = sbr.rel (%p950) target = $region100
        $region99: #{tpu_custom_call.1} parent=95 // pred_region
          %s953 = sand.u32 %s405, 1
          %s954 = scalar_lea.sflag [#allocation4], %s953
          %s955 = sand.u32 %s405, 1
          %s956 = smul.addr %s955, 8
          %s957 = scalar_lea.vmem [#allocation3], %s956
          %959 = dma.done %s954, 128
        $region100: #{tpu_custom_call.1} parent=95 // pred_fallthru
          _
      $region96: #{tpu_custom_call.1} parent=5 // pred_fallthru
        _
    $region6: #{tpu_custom_call.1} parent=1 // loop_footer
      %s28 = sadd.s32 1, %s24
    $region7: #{tpu_custom_call.1} parent=1 // loop_footer_branch
      %23 = sbr.rel target = $region3
    $region8: #{tpu_custom_call.1} parent=1 // loop_exit
      _
    %960 = vsyncpa [#allocation4], 1
    %s961 = scalar_lea.sflag [#allocation4], 1
    %962 = vsyncpa %s961, 1

</llo_original>
